<compile_context>
chip_gen: v7x
topology: tpu7x:2x2x1
jax: 0.10.0
libtpu: 0.0.40
codegen_flags: <defaults>
</compile_context>

<pallas_src>
import jax
import jax.numpy as jnp
from jax import lax
from jax.experimental import pallas as pl
from jax.experimental.pallas import tpu as pltpu


def _round_up(a, m):
    return (a + m - 1) // m * m


def _padded_block_bytes(shape, itemsize):
    """Approx VMEM bytes of one pipeline buffer (last two dims tile-padded)."""
    s = list(shape)
    if len(s) >= 1:
        s[-1] = _round_up(s[-1], 128)
    if len(s) >= 2:
        s[-2] = _round_up(s[-2], 8)
    n = 1
    for d in s:
        n *= d
    return n * itemsize


def auvi_lstm_kernel(maxlen_ref, xp_ref, len_ref, whh_ref, wout_ref, bout_ref,
                     out_ref):
    """One batch-tile of the AuViSubNet forward pass (recurrence + Linear).

    maxlen_ref : SMEM (1,)       int32  -- max(lengths), recurrence loop bound
    xp_ref     : (T, BB, 4H)     bf16   -- time-major x @ W_ih^T + bias,
                                           gate columns permuted to [i,f,o,g]
    len_ref    : (BB, 1)         int32
    whh_ref    : (H, 4H)         bf16   -- transposed, gate-permuted W_hh
    wout_ref   : (H, O_pad)      bf16   -- transposed, lane-padded linear W
    bout_ref   : (1, O_pad)      f32
    out_ref    : (BB, O_pad)     f32
    """
    T, BB, G = xp_ref.shape
    H = whh_ref.shape[0]

    lengths = len_ref[...]                              # (BB, 1) int32
    len_h = jnp.broadcast_to(lengths, (BB, H))          # hoisted broadcast

    def step(t, carry):
        h, c = carry
        # Per-step work: one small MXU matmul + one VPU add + 1x-width EUP.
        # TODO(synk): for very long T, pltpu.matmul_push_rhs could keep W_hh
        # staged in the MXU across the whole recurrence.
        gates = xp_ref[t].astype(jnp.float32) + jnp.dot(
            h.astype(jnp.bfloat16), whh_ref[...],
            preferred_element_type=jnp.float32)          # (BB, 4H) f32
        # Permuted gate order [i, f, o, g]: sigmoid over the contiguous first
        # 3H columns, tanh only over the last H columns.  No mask/select.
        sig = jax.nn.sigmoid(gates[:, :3 * H])
        g_g = jnp.tanh(gates[:, 3 * H:])
        i_g = sig[:, 0 * H:1 * H]
        f_g = sig[:, 1 * H:2 * H]
        o_g = sig[:, 2 * H:3 * H]
        c_new = f_g * c + i_g * g_g
        h_new = o_g * jnp.tanh(c_new)
        valid = t < len_h                                # (BB, H) bool
        return jnp.where(valid, h_new, h), jnp.where(valid, c_new, c)

    h0 = jnp.zeros((BB, H), jnp.float32)
    c0 = jnp.zeros((BB, H), jnp.float32)
    # Recurrence bounded to max(lengths); later steps would be masked no-ops.
    h_last, _ = lax.fori_loop(0, maxlen_ref[0], step, (h0, c0))

    # Dropout is identity in eval mode.  Final Linear (lane-dense O_pad).
    out_ref[...] = (jnp.dot(h_last.astype(jnp.bfloat16), wout_ref[...],
                            preferred_element_type=jnp.float32)
                    + bout_ref[...])


def auvisubnet_forward(x, lengths, params, *, batch_tile=None):
    """x: (B, T, in_size), lengths: (B,) -> (B, out_size). Eval-mode forward."""
    B, T, Din = x.shape
    w_ih, w_hh = params["w_ih"], params["w_hh"]
    b_ih, b_hh = params["b_ih"], params["b_hh"]
    w_out, b_out = params["w_out"], params["b_out"]
    H = w_hh.shape[1]
    O = w_out.shape[0]
    G = 4 * H

    # Gate permutation [i, f, g, o] -> [i, f, o, g] so sigmoid/tanh each act on
    # one contiguous column block inside the kernel.
    perm = jnp.concatenate([jnp.arange(0, 2 * H),
                            jnp.arange(3 * H, 4 * H),
                            jnp.arange(2 * H, 3 * H)])
    w_ih_p = w_ih[perm]                                   # (4H, Din)
    w_hh_p = w_hh[perm]                                   # (4H, H)
    bias_p = (b_ih + b_hh)[perm].astype(jnp.float32)      # (4H,)

    # Batch tiling: pad to a multiple of 16 (bf16 sublane tile).  When B > 16
    # make at least 2 tiles so the "parallel" grid axis can use both v7x
    # TensorCores; the one extra grid step is negligible on single-TC chips.
    if batch_tile is None:
        if B > 16:
            BB = min(_round_up(-(-B // 2), 16), 128)
        else:
            BB = _round_up(max(B, 1), 16)
    else:
        BB = min(_round_up(max(B, 1), 16), batch_tile)
    B_pad = _round_up(B, BB)
    nb = B_pad // BB
    O_pad = _round_up(max(O, 1), 128)                     # lane-dense output

    lengths = lengths.astype(jnp.int32)
    len_p = jnp.zeros((B_pad, 1), jnp.int32).at[:B, 0].set(lengths)
    max_len = jnp.minimum(jnp.max(lengths), T).astype(jnp.int32).reshape(1)

    # Hoisted input projection OUTSIDE the kernel: one MXU matmul over the
    # whole (T, B_pad, Din) sequence, bias folded in, stored bf16 time-major.
    # This feeds the kernel a lane-dense (4H-wide) activation instead of a
    # lane-padded (Din < 128) x block + f32 VMEM scratch.
    x_p = jnp.zeros((B_pad, T, Din), jnp.float32).at[:B].set(
        x.astype(jnp.float32))
    x_tm = jnp.transpose(x_p, (1, 0, 2))                  # (T, B_pad, Din)
    xp = (jnp.einsum("tbd,dg->tbg",
                     x_tm.astype(jnp.bfloat16),
                     jnp.transpose(w_ih_p).astype(jnp.bfloat16),
                     preferred_element_type=jnp.float32)
          + bias_p[None, None, :]).astype(jnp.bfloat16)   # (T, B_pad, 4H)

    whh_t = jnp.transpose(w_hh_p).astype(jnp.bfloat16)    # (H, 4H)
    wout_t = jnp.zeros((H, O_pad), jnp.float32).at[:, :O].set(
        jnp.transpose(w_out).astype(jnp.float32)).astype(jnp.bfloat16)
    bout_p = jnp.zeros((1, O_pad), jnp.float32).at[0, :O].set(
        b_out.astype(jnp.float32))

    # Explicit VMEM budget: every pipelined block is double-buffered.
    per_buf = (_padded_block_bytes((T, BB, G), 2)
               + _padded_block_bytes((BB, 1), 4)
               + _padded_block_bytes((H, G), 2)
               + _padded_block_bytes((H, O_pad), 2)
               + _padded_block_bytes((1, O_pad), 4)
               + _padded_block_bytes((BB, O_pad), 4))
    vmem_needed = 2 * per_buf
    vmem_limit = int(min(max(vmem_needed * 1.5 + (1 << 20), 16 << 20),
                         64 << 20))
    # TODO(synk): for very long T, stream Xp over a T-chunk grid axis (or
    # pltpu.emit_pipeline) instead of one (T, BB, 4H) block per batch tile.

    grid_spec = pltpu.PrefetchScalarGridSpec(
        num_scalar_prefetch=1,
        grid=(nb,),
        in_specs=[
            pl.BlockSpec((T, BB, G), lambda i, ml: (0, i, 0)),   # Xp
            pl.BlockSpec((BB, 1),    lambda i, ml: (i, 0)),      # lengths
            pl.BlockSpec((H, G),     lambda i, ml: (0, 0)),      # W_hh^T
            pl.BlockSpec((H, O_pad), lambda i, ml: (0, 0)),      # W_out^T
            pl.BlockSpec((1, O_pad), lambda i, ml: (0, 0)),      # b_out
        ],
        out_specs=pl.BlockSpec((BB, O_pad), lambda i, ml: (i, 0)),
    )

    out = pl.pallas_call(
        auvi_lstm_kernel,
        out_shape=jax.ShapeDtypeStruct((B_pad, O_pad), jnp.float32),
        grid_spec=grid_spec,
        compiler_params=pltpu.CompilerParams(
            dimension_semantics=("parallel",),
            vmem_limit_bytes=vmem_limit),
    )(max_len, xp, len_p, whh_t, wout_t, bout_p)
    return out[:B, :O]


def reference_forward(x, lengths, params):
    """Pure-JAX f32 reference replicating the PyTorch module in eval mode."""
    w_ih, w_hh, b_ih, b_hh, w_out, b_out = (
        params["w_ih"], params["w_hh"], params["b_ih"],
        params["b_hh"], params["w_out"], params["b_out"])
    B, T, _ = x.shape
    H = w_hh.shape[1]
    h = jnp.zeros((B, H), jnp.float32)
    c = jnp.zeros((B, H), jnp.float32)
    for t in range(T):
        gates = x[:, t, :] @ w_ih.T + h @ w_hh.T + b_ih + b_hh
        i_g = jax.nn.sigmoid(gates[:, 0 * H:1 * H])
        f_g = jax.nn.sigmoid(gates[:, 1 * H:2 * H])
        g_g = jnp.tanh(gates[:, 2 * H:3 * H])
        o_g = jax.nn.sigmoid(gates[:, 3 * H:4 * H])
        c_new = f_g * c + i_g * g_g
        h_new = o_g * jnp.tanh(c_new)
        valid = (t < lengths)[:, None]
        h = jnp.where(valid, h_new, h)
        c = jnp.where(valid, c_new, c)
    return h @ w_out.T + b_out


if __name__ == "__main__":
    # Small, module-consistent shapes.
    B, T, IN_SIZE, HIDDEN, OUT_SIZE = 2, 8, 16, 32, 16

    key = jax.random.PRNGKey(0)
    ks = jax.random.split(key, 8)
    bound = 1.0 / jnp.sqrt(HIDDEN)   # PyTorch LSTM/Linear uniform init range

    params = {
        "w_ih":  jax.random.uniform(ks[0], (4 * HIDDEN, IN_SIZE),
                                    minval=-bound, maxval=bound),
        "w_hh":  jax.random.uniform(ks[1], (4 * HIDDEN, HIDDEN),
                                    minval=-bound, maxval=bound),
        "b_ih":  jax.random.uniform(ks[2], (4 * HIDDEN,),
                                    minval=-bound, maxval=bound),
        "b_hh":  jax.random.uniform(ks[3], (4 * HIDDEN,),
                                    minval=-bound, maxval=bound),
        "w_out": jax.random.uniform(ks[4], (OUT_SIZE, HIDDEN),
                                    minval=-bound, maxval=bound),
        "b_out": jax.random.uniform(ks[5], (OUT_SIZE,),
                                    minval=-bound, maxval=bound),
    }

    x = jax.random.normal(ks[6], (B, T, IN_SIZE), dtype=jnp.float32)
    lengths = jnp.array([T, 5], dtype=jnp.int32)   # variable valid lengths

    y = auvisubnet_forward(x, lengths, params)
    y = jax.block_until_ready(y)

    y_ref = reference_forward(x, lengths, params)
    assert y.shape == (B, OUT_SIZE)
    # bf16 MXU operands / bf16 Xp (f32 accumulation & state) vs f32 reference.
    assert jnp.allclose(y, y_ref, atol=2e-2, rtol=2e-2), "mismatch vs reference"

    print("KERNEL_OK")
</pallas_src>

<mosaic_0001>
module attributes {stable_mosaic.version = 11 : i64} {
  func.func @auvi_lstm_kernel(%arg0: i32, %arg1: memref<1xi32, #tpu.memory_space<smem>>, %arg2: memref<8x16x128xbf16, #tpu.memory_space<vmem>>, %arg3: memref<16x1xi32, #tpu.memory_space<vmem>>, %arg4: memref<32x128xbf16, #tpu.memory_space<vmem>>, %arg5: memref<32x128xbf16, #tpu.memory_space<vmem>>, %arg6: memref<1x128xf32, #tpu.memory_space<vmem>>, %arg7: memref<16x128xf32, #tpu.memory_space<vmem>>) attributes {dimension_semantics = [#tpu.dimension_semantics<parallel>], iteration_bounds = array<i64: 1>, scalar_prefetch = 1 : i64, scratch_operands = 0 : i64, tpu.core_type = #tpu.core_type<tc>, window_params = [{transform_indices = @transform_0, window_bounds = array<i64: 8, 16, 128>}, {transform_indices = @transform_1, window_bounds = array<i64: 16, 1>}, {pipeline_mode = #tpu.pipeline_mode<synchronous>, transform_indices = @transform_2, window_bounds = array<i64: 32, 128>}, {pipeline_mode = #tpu.pipeline_mode<synchronous>, transform_indices = @transform_3, window_bounds = array<i64: 32, 128>}, {pipeline_mode = #tpu.pipeline_mode<synchronous>, transform_indices = @transform_4, window_bounds = array<i64: 1, 128>}, {transform_indices = @transform_5, window_bounds = array<i64: 16, 128>}]} {
    %c0 = arith.constant 0 : index
    %c0_0 = arith.constant 0 : index
    %0 = vector.load %arg3[%c0, %c0_0] : memref<16x1xi32, #tpu.memory_space<vmem>>, vector<16x1xi32>
    %1 = vector.shape_cast %0 : vector<16x1xi32> to vector<16x1xi32>
    %2 = vector.broadcast %1 : vector<16x1xi32> to vector<16x32xi32>
    %cst = arith.constant 0.000000e+00 : f32
    %3 = vector.broadcast %cst : f32 to vector<16x32xf32>
    %cst_1 = arith.constant 0.000000e+00 : f32
    %4 = vector.broadcast %cst_1 : f32 to vector<16x32xf32>
    %c0_2 = arith.constant 0 : index
    %5 = memref.load %arg1[%c0_2] : memref<1xi32, #tpu.memory_space<smem>>
    %c0_i32 = arith.constant 0 : i32
    %6 = arith.subi %5, %c0_i32 : i32
    %7 = arith.addi %c0_i32, %6 : i32
    %c1_i32 = arith.constant 1 : i32
    %8:2 = scf.for %arg8 = %c0_i32 to %7 step %c1_i32 iter_args(%arg9 = %3, %arg10 = %4) -> (vector<16x32xf32>, vector<16x32xf32>)  : i32 {
      %16 = arith.index_cast %arg8 : i32 to index
      %c0_10 = arith.constant 0 : index
      %c0_11 = arith.constant 0 : index
      %17 = vector.load %arg2[%16, %c0_10, %c0_11] : memref<8x16x128xbf16, #tpu.memory_space<vmem>>, vector<1x16x128xbf16>
      %18 = vector.shape_cast %17 : vector<1x16x128xbf16> to vector<16x128xbf16>
      %19 = arith.extf %18 : vector<16x128xbf16> to vector<16x128xf32>
      %20 = arith.truncf %arg9 : vector<16x32xf32> to vector<16x32xbf16>
      %c0_12 = arith.constant 0 : index
      %c0_13 = arith.constant 0 : index
      %21 = vector.load %arg4[%c0_12, %c0_13] : memref<32x128xbf16, #tpu.memory_space<vmem>>, vector<32x128xbf16>
      %cst_14 = arith.constant dense<0.000000e+00> : vector<16x128xf32>
      %22 = tpu.matmul %20, %21, %cst_14 {dimension_numbers = #tpu.dot_dimension_numbers<[1], [0], [0], [1], [0, 0, 1, 1], [], []>} : vector<16x32xbf16>, vector<32x128xbf16>, vector<16x128xf32> -> vector<16x128xf32>
      %23 = arith.addf %19, %22 : vector<16x128xf32>
      %24 = vector.extract_strided_slice %23 {offsets = [0, 0], sizes = [16, 96], strides = [1, 1]} : vector<16x128xf32> to vector<16x96xf32>
      %25 = arith.negf %24 : vector<16x96xf32>
      %26 = math.exp %25 : vector<16x96xf32>
      %cst_15 = arith.constant 1.000000e+00 : f32
      %27 = vector.broadcast %cst_15 : f32 to vector<16x96xf32>
      %28 = arith.addf %27, %26 : vector<16x96xf32>
      %29 = arith.divf %27, %28 : vector<16x96xf32>
      %30 = vector.extract_strided_slice %23 {offsets = [0, 96], sizes = [16, 32], strides = [1, 1]} : vector<16x128xf32> to vector<16x32xf32>
      %31 = math.tanh %30 : vector<16x32xf32>
      %32 = vector.extract_strided_slice %29 {offsets = [0, 0], sizes = [16, 32], strides = [1, 1]} : vector<16x96xf32> to vector<16x32xf32>
      %33 = vector.extract_strided_slice %29 {offsets = [0, 32], sizes = [16, 32], strides = [1, 1]} : vector<16x96xf32> to vector<16x32xf32>
      %34 = vector.extract_strided_slice %29 {offsets = [0, 64], sizes = [16, 32], strides = [1, 1]} : vector<16x96xf32> to vector<16x32xf32>
      %35 = arith.mulf %33, %arg10 : vector<16x32xf32>
      %36 = arith.mulf %32, %31 : vector<16x32xf32>
      %37 = arith.addf %35, %36 : vector<16x32xf32>
      %38 = math.tanh %37 : vector<16x32xf32>
      %39 = arith.mulf %34, %38 : vector<16x32xf32>
      %40 = vector.broadcast %arg8 : i32 to vector<16x32xi32>
      %41 = arith.cmpi slt, %40, %2 : vector<16x32xi32>
      %42 = arith.select %41, %39, %arg9 : vector<16x32xi1>, vector<16x32xf32>
      %43 = arith.select %41, %37, %arg10 : vector<16x32xi1>, vector<16x32xf32>
      scf.yield %42, %43 : vector<16x32xf32>, vector<16x32xf32>
    }
    %9 = arith.truncf %8#0 : vector<16x32xf32> to vector<16x32xbf16>
    %c0_3 = arith.constant 0 : index
    %c0_4 = arith.constant 0 : index
    %10 = vector.load %arg5[%c0_3, %c0_4] : memref<32x128xbf16, #tpu.memory_space<vmem>>, vector<32x128xbf16>
    %cst_5 = arith.constant dense<0.000000e+00> : vector<16x128xf32>
    %11 = tpu.matmul %9, %10, %cst_5 {dimension_numbers = #tpu.dot_dimension_numbers<[1], [0], [0], [1], [0, 0, 1, 1], [], []>} : vector<16x32xbf16>, vector<32x128xbf16>, vector<16x128xf32> -> vector<16x128xf32>
    %c0_6 = arith.constant 0 : index
    %c0_7 = arith.constant 0 : index
    %12 = vector.load %arg6[%c0_6, %c0_7] : memref<1x128xf32, #tpu.memory_space<vmem>>, vector<1x128xf32>
    %13 = vector.broadcast %12 : vector<1x128xf32> to vector<16x128xf32>
    %14 = arith.addf %11, %13 : vector<16x128xf32>
    %c0_8 = arith.constant 0 : index
    %c0_9 = arith.constant 0 : index
    %15 = vector.load %arg7[%c0_8, %c0_9] : memref<16x128xf32, #tpu.memory_space<vmem>>, vector<16x128xf32>
    tpu.vector_store %arg7[%c0_8, %c0_9], %14 {strides = array<i32>} : memref<16x128xf32, #tpu.memory_space<vmem>>, vector<16x128xf32>,
    return
  }
  func.func @transform_0(%arg0: i32, %arg1: memref<1xi32, #tpu.memory_space<smem>>) -> (i32, i32, i32) {
    %c0_i32 = arith.constant 0 : i32
    %c0_i32_0 = arith.constant 0 : i32
    %c0_i32_1 = arith.constant 0 : i32
    return %c0_i32, %arg0, %c0_i32_0 : i32, i32, i32
  }
  func.func @transform_1(%arg0: i32, %arg1: memref<1xi32, #tpu.memory_space<smem>>) -> (i32, i32) {
    %c0_i32 = arith.constant 0 : i32
    %c0_i32_0 = arith.constant 0 : i32
    return %arg0, %c0_i32 : i32, i32
  }
  func.func @transform_2(%arg0: i32, %arg1: memref<1xi32, #tpu.memory_space<smem>>) -> (i32, i32) {
    %c0_i32 = arith.constant 0 : i32
    %c0_i32_0 = arith.constant 0 : i32
    %c0_i32_1 = arith.constant 0 : i32
    return %c0_i32, %c0_i32_0 : i32, i32
  }
  func.func @transform_3(%arg0: i32, %arg1: memref<1xi32, #tpu.memory_space<smem>>) -> (i32, i32) {
    %c0_i32 = arith.constant 0 : i32
    %c0_i32_0 = arith.constant 0 : i32
    %c0_i32_1 = arith.constant 0 : i32
    return %c0_i32, %c0_i32_0 : i32, i32
  }
  func.func @transform_4(%arg0: i32, %arg1: memref<1xi32, #tpu.memory_space<smem>>) -> (i32, i32) {
    %c0_i32 = arith.constant 0 : i32
    %c0_i32_0 = arith.constant 0 : i32
    %c0_i32_1 = arith.constant 0 : i32
    return %c0_i32, %c0_i32_0 : i32, i32
  }
  func.func @transform_5(%arg0: i32, %arg1: memref<1xi32, #tpu.memory_space<smem>>) -> (i32, i32) {
    %c0_i32 = arith.constant 0 : i32
    %c0_i32_0 = arith.constant 0 : i32
    return %arg0, %c0_i32 : i32, i32
  }
}

</mosaic_0001>

<llo_original>
// kernel: tpu_custom_call.1
$region0: #{tpu_custom_call.1}
  #allocation0 [shape = 'u32[]', space=smem, size = 0x4, offset = 0x4, fixed_abs, tag = 'smem constant byte address 0x4 - core index']
  #allocation1 [shape = 'u32[144,128]{1,0:T(1,128)}', space=vmem, size = 0x12000, scoped, tag = 'internal scratch']
  #allocation2 [shape = 's32[1]{0}', space=sflag, size = 0x4, scoped, tag = 'scoped memory for tpu_custom_call.1']
  #allocation3 [shape = 's32[1]{0:T(128)S(6)}', space=smem, size = 0x200, scoped, tag = 'prefetched SMEM operand 0']
  %s0 = inlined_call_operand.<no memory space> [shape: s32[1], index: 0, kind: input, shape index: {}]
  %s1 = inlined_call_operand.hbm [shape: bf16[8,16,128], index: 1, kind: input, shape index: {}]
  %s2 = inlined_call_operand.vmem [shape: s32[16,1], index: 2, kind: input, shape index: {}]
  %s3 = inlined_call_operand.vmem [shape: bf16[32,128], index: 3, kind: input, shape index: {}]
  %s4 = inlined_call_operand.vmem [shape: bf16[32,128], index: 4, kind: input, shape index: {}]
  %s5 = inlined_call_operand.vmem [shape: f32[1,128], index: 5, kind: input, shape index: {}]
  %s6 = inlined_call_operand.hbm [shape: f32[16,128], index: 6, kind: output, shape index: {}]
  %s7 = sld [smem:[#allocation0]]
  $region41: #{tpu_custom_call.1} parent=0
    _
  %s9 = ssub.s32 1, %s7
  %s10 = scalar_select 0, %s9, %s7
  %11 = sst [smem:[#allocation3]] %s0
  $region1: #{tpu_custom_call.1} parent=0
    #allocation4 [shape = 'u8[32768]{0}', space=vmem, size = 0x8000, scoped, tag = 'input window, operand 1, single buffered']
    #allocation5 [shape = 's32[1]{0}', space=sflag, size = 0x4, scoped, tag = 'scoped memory for tpu_custom_call.1']
    #allocation6 [shape = 's32[1]{0}', space=sflag, size = 0x4, scoped, tag = 'scoped memory for tpu_custom_call.1']
    #allocation7 [shape = 'u8[8192]{0}', space=vmem, size = 0x2000, scoped, tag = 'output window, operand 0, single buffered']
    %12 = vsyncpa [#allocation5], 0
    %13 = vsyncpa [#allocation6], 0
    // Predicated region
    $region2: #{tpu_custom_call.1} parent=1 // pred_check
      _
    $region3: #{tpu_custom_call.1} parent=1 // pred_check_branch
      %15 = sbr.rel (0) target = $region5
    $region4: #{tpu_custom_call.1} parent=1 // pred_region
      %s17 = ssub.s32 1024, 1024
      %18 = vsyncadd [#allocation5], %s17
      %s19 = sshll.u32 [#allocation4], 4
      %s20 = int_to_ptr.vmem [resolvable:$true] %s19
      %25 = dma.hbm_to_vmem [thread:$0]  %s1, 1024, %s20, [#allocation5], 64, 64, 4
    $region5: #{tpu_custom_call.1} parent=1 // pred_fallthru
      _
    // Predicated region
    $region6: #{tpu_custom_call.1} parent=1 // pred_check
      _
    $region7: #{tpu_custom_call.1} parent=1 // pred_check_branch
      %27 = sbr.rel (0) target = $region9
    $region8: #{tpu_custom_call.1} parent=1 // pred_region
      _
    $region9: #{tpu_custom_call.1} parent=1 // pred_fallthru
      _
    // Predicated region
    $region10: #{tpu_custom_call.1} parent=1 // pred_check
      _
    $region11: #{tpu_custom_call.1} parent=1 // pred_check_branch
      %29 = sbr.rel (0) target = $region13
    $region12: #{tpu_custom_call.1} parent=1 // pred_region
      _
    $region13: #{tpu_custom_call.1} parent=1 // pred_fallthru
      _
    // Predicated region
    $region14: #{tpu_custom_call.1} parent=1 // pred_check
      _
    $region15: #{tpu_custom_call.1} parent=1 // pred_check_branch
      %31 = sbr.rel (0) target = $region17
    $region16: #{tpu_custom_call.1} parent=1 // pred_region
      _
    $region17: #{tpu_custom_call.1} parent=1 // pred_fallthru
      _
    // Predicated region
    $region18: #{tpu_custom_call.1} parent=1 // pred_check
      _
    $region19: #{tpu_custom_call.1} parent=1 // pred_check_branch
      %33 = sbr.rel (0) target = $region21
    $region20: #{tpu_custom_call.1} parent=1 // pred_region
      _
    $region21: #{tpu_custom_call.1} parent=1 // pred_fallthru
      _
    // Predicated region
    $region22: #{tpu_custom_call.1} parent=1 // pred_check
      _
    $region23: #{tpu_custom_call.1} parent=1 // pred_check_branch
      %35 = sbr.rel (0) target = $region25
    $region24: #{tpu_custom_call.1} parent=1 // pred_region
      %36 = dma.done [#allocation5], 1024
    $region25: #{tpu_custom_call.1} parent=1 // pred_fallthru
      _
    %v38 = vld [vmem:[%s2] sm:$0xff]
    %v39 = vld [vmem:[%s2 + $0x8] sm:$0xff]
    %40 = vset.pattern.permute.xlu0 0
    %41 = vperm.xlu0 %40, %v38
    %v42 = vpop.permute.xlu0 %41
    %43 = vset.pattern.permute.xlu0 0
    %44 = vperm.xlu0 %43, %v39
    %v45 = vpop.permute.xlu0 %44
    %s46 = sld [smem:[#allocation3]]
    // While loop
    $region26: #{tpu_custom_call.1} parent=1 // loop_pre_header
      _
    $region27: #{tpu_custom_call.1} parent=1 // loop_header
      %s48 = sphi 0, %s50
      %p49 = scmp.ge.s32.totalorder %s48, %s46
      %v53 = vphi 0.0, %v182
      %v54 = vphi 0.0, %v183
      %v55 = vphi 0.0, %v184
      %v56 = vphi 0.0, %v185
    $region28: #{tpu_custom_call.1} parent=1 // loop_header_branch
      %52 = sbr.rel (%p49) target = $region32
    $region29: #{tpu_custom_call.1} parent=1 // loop_body
      %s57 = smul.u32 %s48, 2
      %s58 = smul.addr %s57, 4
      %s59 = scalar_lea.vmem [#allocation4], %s58
      %v60 = vld [vmem:[%s59] sm:$0xf]
      %v61 = vld [vmem:[%s59 + $0x4] sm:$0xf]
      %v62 = vunpack.c.l.bf16 %v60
      %v63 = vunpack.c.l.bf16 %v61
      %v64 = vpack.c.bf16 %v54, %v53
      %v65 = vld [vmem:[%s3] sm:$0xf]
      %v66 = vld [vmem:[%s3 + $0x4] sm:$0xf]
      %v67 = vld [vmem:[%s3 + $0x8] sm:$0xf]
      %v68 = vld [vmem:[%s3 + $0xc] sm:$0xf]
      %70 = vrot.lane.b32.xlu0 %v64, 64
      %v71 = vpop.permute.xlu0 %70
      %v76 = vunpack.c.l.b16 %v65
      %v77 = vunpack.c.l.b16 %v66
      %v78 = vunpack.c.l.b16 %v67
      %v79 = vunpack.c.l.b16 %v68
      %v80 = vpack.c.b16 %v77, %v76
      %v81 = vpack.c.b16 %v79, %v78
      %vm84 = vcmask 261120
      %v86 = vsel %vm84, %v71, 0
      %88 = vmatprep.subr.bf16.mxu0 0
      %89 = vmatpush1.bf16.msra.mxu0 %v80
      %90 = vmatprep.subr.bf16.mxu0 0
      %91 = vmatpush1.bf16.msra.mxu0 %v81
      %92 = vmatprep.subr.bf16.mxu0 0
      %93 = vmatpush1.bf16.msra.mxu0 0
      %94 = vmatprep.subr.bf16.mxu0 0
      %95 = vmatpush1.bf16.msra.mxu0 0
      %96 = vmatprep.subr.bf16.mxu0 0
      %97 = vmatpush1.bf16.msra.mxu0 0
      %98 = vmatprep.subr.bf16.mxu0 0
      %99 = vmatpush1.bf16.msra.mxu0 0
      %100 = vmatprep.subr.bf16.mxu0 0
      %101 = vmatpush1.bf16.msra.mxu0 0
      %102 = vmatprep.subr.bf16.mxu0 0
      %103 = vmatpush1.bf16.msra.mxu0 0
      %104 = vmatprep.subr.bf16.mxu0 0
      %105 = vmatpush1.bf16.msra.mxu0 0
      %106 = vmatprep.subr.bf16.mxu0 0
      %107 = vmatpush1.bf16.msra.mxu0 0
      %108 = vmatprep.subr.bf16.mxu0 0
      %109 = vmatpush1.bf16.msra.mxu0 0
      %110 = vmatprep.subr.bf16.mxu0 0
      %111 = vmatpush1.bf16.msra.mxu0 0
      %112 = vmatprep.subr.bf16.mxu0 0
      %113 = vmatpush1.bf16.msra.mxu0 0
      %114 = vmatprep.subr.bf16.mxu0 0
      %115 = vmatpush1.bf16.msra.mxu0 0
      %116 = vmatprep.subr.bf16.mxu0 0
      %117 = vmatpush1.bf16.msra.mxu0 0
      %118 = vmatprep.subr.bf16.mxu0 0
      %119 = vmatpush1.bf16.msra.mxu0 0
      %120 = vmatprep.mubr.bf16.mxu0 0
      %121 = vmatmul.mubr.bf16.gmra.mrb[0].mxu0 %v86
      %v122 = vpop.f32.mrb[0].mxu0
      %v123 = vadd.f32 0.0, %v122
      %v124 = vpop.f32.mrb[0].mxu0
      %v125 = vpop.f32.mrb[0].mxu0
      %v126 = vadd.f32 0.0, %v125
      %v127 = vpop.f32.mrb[0].mxu0
      %128 = vdwg.mxu0
      %v129 = vadd.f32 %v62, %v123
      %v130 = vadd.f32 %v63, %v126
      %v131 = vxor.u32 %v129, 2147483648
      %v132 = vxor.u32 %v130, 2147483648
      %v133 = vmul.f32 %v131, 1.442695
      %v134 = vpow.pop %v133
      %v135 = vmul.f32 %v132, 1.442695
      %v136 = vpow.pop %v135
      %v137 = vadd.f32 %v134, 1.0
      %v138 = vadd.f32 %v136, 1.0
      %v139 = vrcp.pop %v137
      %v140 = vmul.f32 1.0, %v139
      %v141 = vrcp.pop %v138
      %v142 = vmul.f32 1.0, %v141
      %v143 = vtanh.pop %v129
      %v144 = vtanh.pop %v130
      %v145 = vmul.f32 %v140, %v55
      %v146 = vmul.f32 %v142, %v56
      %149 = vrot.lane.b32.xlu0 %v143, 32
      %v150 = vpop.permute.xlu0 %149
      %151 = vrot.lane.b32.xlu0 %v144, 32
      %v152 = vpop.permute.xlu0 %151
      %v155 = vmul.f32 %v140, %v150
      %v156 = vmul.f32 %v142, %v152
      %159 = vrot.lane.b32.xlu0 %v155, 32
      %v160 = vpop.permute.xlu0 %159
      %161 = vrot.lane.b32.xlu0 %v156, 32
      %v162 = vpop.permute.xlu0 %161
      %v165 = vadd.f32 %v145, %v160
      %v166 = vadd.f32 %v146, %v162
      %v167 = vtanh.pop %v165
      %v168 = vtanh.pop %v166
      %171 = vrot.lane.b32.xlu0 %v167, 32
      %v172 = vpop.permute.xlu0 %171
      %173 = vrot.lane.b32.xlu0 %v168, 32
      %v174 = vpop.permute.xlu0 %173
      %v177 = vmul.f32 %v140, %v172
      %v178 = vmul.f32 %v142, %v174
      %v179 = vstv %s48
      %vm180 = vcmp.lt.s32.totalorder %v179, %v42
      %vm181 = vcmp.lt.s32.totalorder %v179, %v45
      %v182 = vsel %vm180, %v177, %v53
      %v183 = vsel %vm181, %v178, %v54
      %v184 = vsel %vm180, %v165, %v55
      %v185 = vsel %vm181, %v166, %v56
    $region30: #{tpu_custom_call.1} parent=1 // loop_footer
      %s50 = sadd.s32 %s48, 1
    $region31: #{tpu_custom_call.1} parent=1 // loop_footer_branch
      %47 = sbr.rel target = $region27
    $region32: #{tpu_custom_call.1} parent=1 // loop_exit
      _
    %v186 = vpack.c.bf16 %v54, %v53
    %v187 = vld [vmem:[%s4] sm:$0xf]
    %v188 = vld [vmem:[%s4 + $0x4] sm:$0xf]
    %v189 = vld [vmem:[%s4 + $0x8] sm:$0xf]
    %v190 = vld [vmem:[%s4 + $0xc] sm:$0xf]
    %v191 = vld [vmem:[%s5] sm:$0x1]
    %v193 = vlaneseq
    %v194 = vshrl.u32 %v193, 7
    %v195 = vsub.s32 0, %v194
    %v196 = vrot.slane %v191, %v195
    %199 = vrot.lane.b32.xlu0 %v186, 64
    %v200 = vpop.permute.xlu0 %199
    %v205 = vunpack.c.l.b16 %v187
    %v206 = vunpack.c.l.b16 %v188
    %v207 = vunpack.c.l.b16 %v189
    %v208 = vunpack.c.l.b16 %v190
    %v209 = vpack.c.b16 %v206, %v205
    %v210 = vpack.c.b16 %v208, %v207
    %vm213 = vcmask 261120
    %v215 = vsel %vm213, %v200, 0
    %217 = vmatprep.subr.bf16.mxu0 0
    %218 = vmatpush1.bf16.msra.mxu0 %v209
    %219 = vmatprep.subr.bf16.mxu0 0
    %220 = vmatpush1.bf16.msra.mxu0 %v210
    %221 = vmatprep.subr.bf16.mxu0 0
    %222 = vmatpush1.bf16.msra.mxu0 0
    %223 = vmatprep.subr.bf16.mxu0 0
    %224 = vmatpush1.bf16.msra.mxu0 0
    %225 = vmatprep.subr.bf16.mxu0 0
    %226 = vmatpush1.bf16.msra.mxu0 0
    %227 = vmatprep.subr.bf16.mxu0 0
    %228 = vmatpush1.bf16.msra.mxu0 0
    %229 = vmatprep.subr.bf16.mxu0 0
    %230 = vmatpush1.bf16.msra.mxu0 0
    %231 = vmatprep.subr.bf16.mxu0 0
    %232 = vmatpush1.bf16.msra.mxu0 0
    %233 = vmatprep.subr.bf16.mxu0 0
    %234 = vmatpush1.bf16.msra.mxu0 0
    %235 = vmatprep.subr.bf16.mxu0 0
    %236 = vmatpush1.bf16.msra.mxu0 0
    %237 = vmatprep.subr.bf16.mxu0 0
    %238 = vmatpush1.bf16.msra.mxu0 0
    %239 = vmatprep.subr.bf16.mxu0 0
    %240 = vmatpush1.bf16.msra.mxu0 0
    %241 = vmatprep.subr.bf16.mxu0 0
    %242 = vmatpush1.bf16.msra.mxu0 0
    %243 = vmatprep.subr.bf16.mxu0 0
    %244 = vmatpush1.bf16.msra.mxu0 0
    %245 = vmatprep.subr.bf16.mxu0 0
    %246 = vmatpush1.bf16.msra.mxu0 0
    %247 = vmatprep.subr.bf16.mxu0 0
    %248 = vmatpush1.bf16.msra.mxu0 0
    %249 = vmatprep.mubr.bf16.mxu0 0
    %250 = vmatmul.mubr.bf16.gmra.mrb[0].mxu0 %v215
    %v251 = vpop.f32.mrb[0].mxu0
    %v252 = vadd.f32 %v196, %v251
    %v253 = vpop.f32.mrb[0].mxu0
    %v254 = vpop.f32.mrb[0].mxu0
    %v255 = vadd.f32 %v196, %v254
    %v256 = vpop.f32.mrb[0].mxu0
    %257 = vdwg.mxu0
    %258 = vst [vmem:[#allocation7] sm:$0xff] %v252
    %259 = vst [vmem:[#allocation7 + $0x8] sm:$0xff] %v255
    // Predicated region
    $region33: #{tpu_custom_call.1} parent=1 // pred_check
      _
    $region34: #{tpu_custom_call.1} parent=1 // pred_check_branch
      %261 = sbr.rel (0) target = $region36
    $region35: #{tpu_custom_call.1} parent=1 // pred_region
      %s263 = ssub.s32 256, 256
      %264 = vsyncadd [#allocation6], %s263
      %s265 = sshll.u32 [#allocation7], 4
      %s266 = int_to_ptr.vmem [resolvable:$true] %s265
      %271 = dma.vmem_to_hbm [thread:$0]  %s266, 256, %s6, [#allocation6], 128, 128, 8
    $region36: #{tpu_custom_call.1} parent=1 // pred_fallthru
      _
    // Predicated region
    $region37: #{tpu_custom_call.1} parent=1 // pred_check
      _
    $region38: #{tpu_custom_call.1} parent=1 // pred_check_branch
      %273 = sbr.rel (0) target = $region40
    $region39: #{tpu_custom_call.1} parent=1 // pred_region
      %274 = dma.done [#allocation6], 256
    $region40: #{tpu_custom_call.1} parent=1 // pred_fallthru
      _
    %275 = vsyncpa [#allocation5], 1
    %276 = vsyncpa [#allocation6], 1

</llo_original>
